<compile_context>
chip_gen: v5e
topology: v5e:2x2
jax: 0.10.0
libtpu: 0.0.40
codegen_flags: <defaults>
</compile_context>

<pallas_src>
import jax
import jax.numpy as jnp
from jax.experimental import pallas as pl
from jax.experimental.pallas import tpu as pltpu

LANE = 128     # TPU vreg lane width
SUBLANE = 8    # TPU vreg sublane height (f32)


def _round_up(x, m):
    return ((x + m - 1) // m) * m


def _linear_kernel(x_ref, w_ref, b_ref, o_ref):
    # x_ref: (TB, D), w_ref: (D, C_pad), b_ref: (1, C), o_ref: (TB, C)
    c = o_ref.shape[-1]
    acc = jnp.dot(x_ref[...], w_ref[...], preferred_element_type=jnp.float32)
    o_ref[...] = (acc[:, :c] + b_ref[...]).astype(o_ref.dtype)


def prepare_params(weight, bias):
    """One-time param prep (model-load time).

    weight: (C, D) in the PyTorch nn.Linear layout; bias: (C,).
    Returns the weight pre-transposed and lane-padded to (D, C_pad) with
    C_pad a multiple of 128, and the bias as (1, C) (unpadded).
    """
    C, D = weight.shape
    c_pad = _round_up(C, LANE)
    w_t = (jnp.zeros((D, c_pad), dtype=jnp.float32)
           .at[:, :C].set(jnp.asarray(weight, jnp.float32).T))
    b2 = jnp.asarray(bias, jnp.float32).reshape(1, C)
    return w_t, b2


def _choose_tb(B, D, C, *, tb_max=8192, tb_align=256,
               stream_vmem_budget=18 * 1024 * 1024, target_steps=8):
    """Pick the batch tile size.

    VMEM cost per grid step (double-buffered x-in + out, lane-padded to 128):
        2 * TB * 4 * (round_up(D,128) + round_up(C,128))
    kept under `stream_vmem_budget`, leaving headroom inside the 32 MiB
    vmem_limit_bytes for the resident weight/bias and compiler temps.
    TB is also capped so the grid has >= `target_steps` steps when B is large,
    giving both v7x TensorCores work and the pipeline blocks to overlap.
    """
    if B <= tb_align:
        return B  # single tile; block dims == full array dims (always legal)
    d_pad = _round_up(D, LANE)
    c_pad = _round_up(C, LANE)
    tb_budget = stream_vmem_budget // (2 * 4 * (d_pad + c_pad))
    tb_steps = _round_up(pl.cdiv(B, target_steps), tb_align)
    tb = min(tb_max, tb_budget, tb_steps)
    if tb >= tb_align:
        tb = (tb // tb_align) * tb_align
    else:
        tb = max(SUBLANE, (tb // SUBLANE) * SUBLANE)
    return tb


def logistic_regression_forward(x, w_t_pad, b2):
    """x: (B, D) f32; w_t_pad: (D, C_pad) f32; b2: (1, C) f32 -> logits (B, C) f32."""
    B, D = x.shape
    C = b2.shape[1]
    C_pad = w_t_pad.shape[1]

    TB = _choose_tb(B, D, C)
    grid = (pl.cdiv(B, TB),)  # ragged final block handled by Pallas (store-masked)

    return pl.pallas_call(
        _linear_kernel,
        out_shape=jax.ShapeDtypeStruct((B, C), jnp.float32),
        grid_spec=pltpu.PrefetchScalarGridSpec(
            num_scalar_prefetch=0,
            grid=grid,
            in_specs=[
                # x streams per batch tile (double-buffered by the pipeline).
                pl.BlockSpec((TB, D), lambda i: (i, 0)),
                # Weight / bias: constant block index -> fetched once,
                # VMEM-resident across all grid steps.
                pl.BlockSpec((D, C_pad), lambda i: (0, 0)),
                pl.BlockSpec((1, C), lambda i: (0, 0)),
            ],
            # Unpadded output block: only B*C*4 bytes of HBM writes.
            out_specs=pl.BlockSpec((TB, C), lambda i: (i, 0)),
        ),
        compiler_params=pltpu.CompilerParams(
            # Independent batch tiles: shard across v7x's two TensorCores.
            dimension_semantics=("parallel",),
            # Explicit scoped-VMEM limit: safe on v5e/v6e (128 MiB physical)
            # and v7x (64 MiB physical); TB budget keeps us well inside it.
            vmem_limit_bytes=32 * 1024 * 1024,
        ),
    )(x, w_t_pad, b2)


if __name__ == "__main__":
    # Deterministic synthetic parameters / inputs (no checkpoint load).
    batch = 8
    input_dim = 32
    num_classes = 4

    key = jax.random.PRNGKey(0)
    kx, kw, kb, kx2 = jax.random.split(key, 4)

    x = jax.random.normal(kx, (batch, input_dim), dtype=jnp.float32)
    # Mimic nn.Linear default init scale (uniform in +-1/sqrt(input_dim)).
    bound = 1.0 / jnp.sqrt(jnp.float32(input_dim))
    weight = jax.random.uniform(kw, (num_classes, input_dim),
                                dtype=jnp.float32, minval=-bound, maxval=bound)
    bias = jax.random.uniform(kb, (num_classes,),
                              dtype=jnp.float32, minval=-bound, maxval=bound)

    # One-time param prep (transpose + lane padding), outside the hot path.
    w_t_pad, b2 = prepare_params(weight, bias)

    fwd = jax.jit(logistic_regression_forward)

    # Small shape consistent with the module.
    out = jax.block_until_ready(fwd(x, w_t_pad, b2))
    ref = x @ weight.T + bias
    assert out.shape == (batch, num_classes)
    assert jnp.allclose(out, ref, atol=1e-5, rtol=1e-5)

    # Also exercise the multi-step grid + ragged final block (B % TB != 0).
    big_b = 1000
    x_big = jax.random.normal(kx2, (big_b, input_dim), dtype=jnp.float32)
    out_big = jax.block_until_ready(fwd(x_big, w_t_pad, b2))
    ref_big = x_big @ weight.T + bias
    assert out_big.shape == (big_b, num_classes)
    assert jnp.allclose(out_big, ref_big, atol=1e-5, rtol=1e-5)

    print("KERNEL_OK")
</pallas_src>

<mosaic_0001>
module attributes {stable_mosaic.version = 11 : i64} {
  func.func @_linear_kernel(%arg0: i32, %arg1: memref<8x32xf32, #tpu.memory_space<vmem>>, %arg2: memref<32x128xf32, #tpu.memory_space<vmem>>, %arg3: memref<1x4xf32, #tpu.memory_space<vmem>>, %arg4: memref<8x4xf32, #tpu.memory_space<vmem>>) attributes {dimension_semantics = [#tpu.dimension_semantics<parallel>], iteration_bounds = array<i64: 1>, scalar_prefetch = 0 : i64, scratch_operands = 0 : i64, tpu.core_type = #tpu.core_type<tc>, window_params = [{transform_indices = @transform_0, window_bounds = array<i64: 8, 32>}, {pipeline_mode = #tpu.pipeline_mode<synchronous>, transform_indices = @transform_1, window_bounds = array<i64: 32, 128>}, {pipeline_mode = #tpu.pipeline_mode<synchronous>, transform_indices = @transform_2, window_bounds = array<i64: 1, 4>}, {transform_indices = @transform_3, window_bounds = array<i64: 8, 4>}]} {
    %c0 = arith.constant 0 : index
    %c0_0 = arith.constant 0 : index
    %0 = vector.load %arg1[%c0, %c0_0] : memref<8x32xf32, #tpu.memory_space<vmem>>, vector<8x32xf32>
    %c0_1 = arith.constant 0 : index
    %c0_2 = arith.constant 0 : index
    %1 = vector.load %arg2[%c0_1, %c0_2] : memref<32x128xf32, #tpu.memory_space<vmem>>, vector<32x128xf32>
    %cst = arith.constant dense<0.000000e+00> : vector<8x128xf32>
    %2 = tpu.matmul %0, %1, %cst {dimension_numbers = #tpu.dot_dimension_numbers<[1], [0], [0], [1], [0, 0, 1, 1], [], []>} : vector<8x32xf32>, vector<32x128xf32>, vector<8x128xf32> -> vector<8x128xf32>
    %3 = vector.extract_strided_slice %2 {offsets = [0, 0], sizes = [8, 4], strides = [1, 1]} : vector<8x128xf32> to vector<8x4xf32>
    %c0_3 = arith.constant 0 : index
    %c0_4 = arith.constant 0 : index
    %4 = vector.load %arg3[%c0_3, %c0_4] : memref<1x4xf32, #tpu.memory_space<vmem>>, vector<1x4xf32>
    %5 = vector.broadcast %4 : vector<1x4xf32> to vector<8x4xf32>
    %6 = arith.addf %3, %5 : vector<8x4xf32>
    %c0_5 = arith.constant 0 : index
    %c0_6 = arith.constant 0 : index
    %7 = vector.load %arg4[%c0_5, %c0_6] : memref<8x4xf32, #tpu.memory_space<vmem>>, vector<8x4xf32>
    tpu.vector_store %arg4[%c0_5, %c0_6], %6 {strides = array<i32>} : memref<8x4xf32, #tpu.memory_space<vmem>>, vector<8x4xf32>,
    return
  }
  func.func @transform_0(%arg0: i32) -> (i32, i32) {
    %c0_i32 = arith.constant 0 : i32
    %c0_i32_0 = arith.constant 0 : i32
    return %arg0, %c0_i32 : i32, i32
  }
  func.func @transform_1(%arg0: i32) -> (i32, i32) {
    %c0_i32 = arith.constant 0 : i32
    %c0_i32_0 = arith.constant 0 : i32
    %c0_i32_1 = arith.constant 0 : i32
    return %c0_i32, %c0_i32_0 : i32, i32
  }
  func.func @transform_2(%arg0: i32) -> (i32, i32) {
    %c0_i32 = arith.constant 0 : i32
    %c0_i32_0 = arith.constant 0 : i32
    %c0_i32_1 = arith.constant 0 : i32
    return %c0_i32, %c0_i32_0 : i32, i32
  }
  func.func @transform_3(%arg0: i32) -> (i32, i32) {
    %c0_i32 = arith.constant 0 : i32
    %c0_i32_0 = arith.constant 0 : i32
    return %arg0, %c0_i32 : i32, i32
  }
}

</mosaic_0001>

<llo_original>
// kernel: logistic_regression_forward.1
$region0: #{logistic_regression_forward.1}
  #allocation0 [shape = 'u32[]', space=smem, size = 0x4, offset = 0x4, fixed_abs, tag = 'smem constant byte address 0x4 - core index']
  #allocation1 [shape = 'u32[72,128]{1,0:T(1,128)}', space=vmem, size = 0x9000, scoped, tag = 'internal scratch']
  %s0 = inlined_call_operand.hbm [shape: f32[8,32], index: 0, kind: input, shape index: {}]
  %s1 = inlined_call_operand.hbm [shape: f32[32,128], index: 1, kind: input, shape index: {}]
  %s2 = inlined_call_operand.vmem [shape: f32[1,4], index: 2, kind: input, shape index: {}]
  %s3 = inlined_call_operand.vmem [shape: f32[8,4], index: 3, kind: output, shape index: {}]
  %s4 = sld [smem:[#allocation0]]
  $region30: #{logistic_regression_forward.1} parent=0
    _
  %s6 = ssub.s32 1, %s4
  %s7 = scalar_select 0, %s6, %s4
  $region1: #{logistic_regression_forward.1} parent=0
    #allocation2 [shape = 'u8[4096]{0}', space=vmem, size = 0x1000, scoped, tag = 'input window, operand 0, single buffered']
    #allocation3 [shape = 's32[1]{0}', space=sflag, size = 0x4, scoped, tag = 'scoped memory for logistic_regression_forward.1']
    #allocation4 [shape = 'u8[16384]{0}', space=vmem, size = 0x4000, scoped, tag = 'input window, operand 1, single buffered']
    #allocation5 [shape = 's32[1]{0}', space=sflag, size = 0x4, scoped, tag = 'scoped memory for logistic_regression_forward.1']
    %8 = vsyncpa [#allocation3], 0
    %9 = vsyncpa [#allocation5], 0
    // Predicated region
    $region2: #{logistic_regression_forward.1} parent=1 // pred_check
      _
    $region3: #{logistic_regression_forward.1} parent=1 // pred_check_branch
      %11 = sbr.rel (0) target = $region5
    $region4: #{logistic_regression_forward.1} parent=1 // pred_region
      %13 = vsyncadd [#allocation3], 0
      %s15 = sshll.u32 %s0, 4
      %s16 = int_to_ptr.hbm [resolvable:$true] %s15
      %s17 = sshll.u32 [#allocation2], 4
      %s18 = int_to_ptr.vmem [resolvable:$true] %s17
      %20 = dma.hbm_to_vmem [thread:$0]  %s16, 128, %s18, [#allocation3]
    $region5: #{logistic_regression_forward.1} parent=1 // pred_fallthru
      _
    // Predicated region
    $region6: #{logistic_regression_forward.1} parent=1 // pred_check
      _
    $region7: #{logistic_regression_forward.1} parent=1 // pred_check_branch
      %22 = sbr.rel (0) target = $region9
    $region8: #{logistic_regression_forward.1} parent=1 // pred_region
      %24 = vsyncadd [#allocation5], 0
      %s25 = sshll.u32 %s1, 4
      %s26 = int_to_ptr.hbm [resolvable:$true] %s25
      %s27 = sshll.u32 [#allocation4], 4
      %s28 = int_to_ptr.vmem [resolvable:$true] %s27
      %33 = dma.hbm_to_vmem [thread:$0]  %s26, 512, %s28, [#allocation5], 128, 128, 8
    $region9: #{logistic_regression_forward.1} parent=1 // pred_fallthru
      _
    // Predicated region
    $region10: #{logistic_regression_forward.1} parent=1 // pred_check
      _
    $region11: #{logistic_regression_forward.1} parent=1 // pred_check_branch
      %35 = sbr.rel (0) target = $region13
    $region12: #{logistic_regression_forward.1} parent=1 // pred_region
      _
    $region13: #{logistic_regression_forward.1} parent=1 // pred_fallthru
      _
    // Predicated region
    $region14: #{logistic_regression_forward.1} parent=1 // pred_check
      _
    $region15: #{logistic_regression_forward.1} parent=1 // pred_check_branch
      %37 = sbr.rel (0) target = $region17
    $region16: #{logistic_regression_forward.1} parent=1 // pred_region
      %39 = dma.done [#allocation3], 128
    $region17: #{logistic_regression_forward.1} parent=1 // pred_fallthru
      _
    // Predicated region
    $region18: #{logistic_regression_forward.1} parent=1 // pred_check
      _
    $region19: #{logistic_regression_forward.1} parent=1 // pred_check_branch
      %41 = sbr.rel (0) target = $region21
    $region20: #{logistic_regression_forward.1} parent=1 // pred_region
      %43 = dma.done [#allocation5], 512
    $region21: #{logistic_regression_forward.1} parent=1 // pred_fallthru
      _
    %v44 = vld [vmem:[#allocation2] sm:$0xff]
    %v45 = vld [vmem:[#allocation4] sm:$0xff]
    %v46 = vld [vmem:[#allocation4 + $0x8] sm:$0xff]
    %v47 = vld [vmem:[#allocation4 + $0x10] sm:$0xff]
    %v48 = vld [vmem:[#allocation4 + $0x18] sm:$0xff]
    %vm49 = vcmask 261120
    %v51 = vsel %vm49, %v44, 0
    %53 = vmatpush.msra.mxu0 0.0
    %54 = vmatpush.msra.mxu0 0.0
    %55 = vmatpush.msra.mxu0 0.0
    %56 = vmatpush.msra.mxu0 0.0
    %57 = vmatpush.msra.mxu0 0.0
    %58 = vmatpush.msra.mxu0 0.0
    %59 = vmatpush.msra.mxu0 0.0
    %60 = vmatpush.msra.mxu0 0.0
    %61 = vmatpush.msra.mxu0 0.0
    %62 = vmatpush.msra.mxu0 0.0
    %63 = vmatpush.msra.mxu0 0.0
    %64 = vmatpush.msra.mxu0 0.0
    %65 = vmatpush.msra.mxu0 %v48
    %66 = vmatpush.msra.mxu0 %v47
    %67 = vmatpush.msra.mxu0 %v46
    %68 = vmatpush.msra.mxu0 %v45
    %69 = vmatmul.f32.gmra.mxu0 %v51
    %v70 = vpop.f32.mrf.mxu0
    %v71 = vadd.f32 0.0, %v70
    %72 = vdwg.mxu0
    %v73 = vld [vmem:[%s2] sm:$0x1]
    %v75 = vperm.slane %v73, 0
    %v77 = vadd.f32 %v71, %v75
    %vm78 = vcmask 31744
    %79 = vst.msk [vmem:[%s3] sm:$0xff] %vm78, %v77
    // Predicated region
    $region22: #{logistic_regression_forward.1} parent=1 // pred_check
      _
    $region23: #{logistic_regression_forward.1} parent=1 // pred_check_branch
      %81 = sbr.rel (0) target = $region25
    $region24: #{logistic_regression_forward.1} parent=1 // pred_region
      _
    $region25: #{logistic_regression_forward.1} parent=1 // pred_fallthru
      _
    // Predicated region
    $region26: #{logistic_regression_forward.1} parent=1 // pred_check
      _
    $region27: #{logistic_regression_forward.1} parent=1 // pred_check_branch
      %83 = sbr.rel (0) target = $region29
    $region28: #{logistic_regression_forward.1} parent=1 // pred_region
      _
    $region29: #{logistic_regression_forward.1} parent=1 // pred_fallthru
      _
    %84 = vsyncpa [#allocation3], 1
    %85 = vsyncpa [#allocation5], 1

</llo_original>
